<compile_context>
chip_gen: v7x
topology: tpu7x:2x2x1
jax: 0.10.0
libtpu: 0.0.40
codegen_flags: <defaults>
</compile_context>

<pallas_src>
import math
from typing import List

import jax
import jax.numpy as jnp
from jax.experimental import pallas as pl
from jax.experimental.pallas import tpu as pltpu


def _round_up(x: int, m: int) -> int:
    return ((x + m - 1) // m) * m


def make_prediction_kernel(layer_slices, n_layers: int):
    """Fused kernel: MXU mean-pool matmul, then block-diagonal fused MLP layers.

    layer_slices: list of (w_row_off, w_rows, b_row_off) static offsets into the
    packed parameter buffer (every tile has lane width PADW).
    """

    def kernel(s_ref, x_ref, p_ref, out_ref):
        # Global mean over (H, W) done on the MXU:
        # (Bp, BHWp) @ (BHWp, Cp) -> (Bp, Cp); S holds 1/HW on the batch blocks.
        h = jnp.dot(s_ref[...], x_ref[...], preferred_element_type=jnp.float32)
        for i in range(n_layers):
            w_off, w_rows, b_off = layer_slices[i]
            w = p_ref[w_off:w_off + w_rows, :]              # static slice, zero cost
            b = p_ref[b_off:b_off + 1, :]                   # (1, PADW) bias row
            h = jnp.dot(h, w, preferred_element_type=jnp.float32) + b
            if i < n_layers - 1:                            # ReLU on all but last layer
                h = jnp.maximum(h, 0.0)
        out_ref[...] = h.astype(out_ref.dtype)              # lane-dense (Bp, 128) store

    return kernel


def init_linear(key, fan_in: int, fan_out: int):
    """nn.Linear-style init (uniform +-1/sqrt(fan_in)); weight stored as (in, out)."""
    kw, kb = jax.random.split(key)
    bound = 1.0 / math.sqrt(fan_in)
    w = jax.random.uniform(kw, (fan_in, fan_out), jnp.float32, -bound, bound)
    b = jax.random.uniform(kb, (1, fan_out), jnp.float32, -bound, bound)
    return w, b


def make_head_params(key, in_channels: int, hidden_layers: List[int], out_size: int):
    dims = [in_channels] + list(hidden_layers) + [out_size]
    params = []
    for i in range(len(dims) - 1):
        key, sub = jax.random.split(key)
        params.append(init_linear(sub, dims[i], dims[i + 1]))
    return params, key


def prediction_network(x, policy_params, value_params):
    """x: (B, C, H, W) float32. Returns (policy_logits (B,A), value (B,2S+1))."""
    B, C, H, W = x.shape
    HW = H * W
    A = policy_params[-1][0].shape[1]
    Vdim = value_params[-1][0].shape[1]

    # Fused path assumes both heads have the same depth (true for this module config).
    # TODO(synk): add an unfused fallback for heads of unequal depth.
    assert len(policy_params) == len(value_params)
    L = len(policy_params)

    out_w = [policy_params[i][0].shape[1] + value_params[i][0].shape[1] for i in range(L)]
    PADW = _round_up(max(out_w), 128)           # lane-dense width for all hidden/output tiles
    Cp = _round_up(C, 128)                      # lane-dense channel dim for the x slab
    BHW = B * HW
    BHWp = _round_up(BHW, 128)                  # contraction dim of the pooling matmul
    Bp = _round_up(B, 8)                        # sublane-dense batch

    # ---- Averaging matrix S: pooled = S @ X2 (runs on the MXU inside the kernel). ----
    s = jnp.zeros((Bp, BHWp), jnp.float32)
    row_ids = jnp.arange(BHWp) // HW            # which batch each spatial row belongs to
    valid = jnp.arange(BHWp) < BHW
    s = s.at[row_ids, jnp.arange(BHWp)].set(jnp.where(valid, 1.0 / float(HW), 0.0))

    # ---- Pack all parameters into ONE contiguous (rows, PADW) f32 buffer. ----
    tiles = []
    layer_slices = []
    row = 0

    # Layer 0: concat policy/value first-layer weights along the output axis.
    w0 = jnp.concatenate([policy_params[0][0], value_params[0][0]], axis=1)   # (C, out_w[0])
    b0 = jnp.concatenate([policy_params[0][1], value_params[0][1]], axis=1)   # (1, out_w[0])
    w0t = jnp.pad(w0, ((0, Cp - C), (0, PADW - out_w[0])))                    # (Cp, PADW)
    b0t = jnp.pad(b0, ((0, 7), (0, PADW - out_w[0])))                         # (8, PADW), row 0 = bias
    tiles += [w0t, b0t]
    layer_slices.append((row, Cp, row + Cp))
    row += Cp + 8

    # Layers 1..L-1: block-diagonal fused (PADW, PADW) weights; padded cols/rows are zero
    # so the padded lanes of the hidden state stay exactly zero through ReLU.
    for i in range(1, L):
        wp, bp = policy_params[i]
        wv, bv = value_params[i]
        in_p, out_p = wp.shape
        in_v, out_v = wv.shape
        wi = jnp.zeros((PADW, PADW), jnp.float32)
        wi = wi.at[:in_p, :out_p].set(wp)
        wi = wi.at[in_p:in_p + in_v, out_p:out_p + out_v].set(wv)
        bi = jnp.zeros((8, PADW), jnp.float32)
        bi = bi.at[0, :out_p].set(bp[0])
        bi = bi.at[0, out_p:out_p + out_v].set(bv[0])
        tiles += [wi, bi]
        layer_slices.append((row, PADW, row + PADW))
        row += PADW + 8

    params_buf = jnp.concatenate(tiles, axis=0)                               # (row, PADW)

    # ---- Present x as a lane-dense (BHWp, Cp) slab: rows = (batch, h, w), lanes = channels. ----
    x2 = jnp.transpose(x.astype(jnp.float32), (0, 2, 3, 1)).reshape(BHW, C)
    x2 = jnp.pad(x2, ((0, BHWp - BHW), (0, Cp - C)))

    kernel = make_prediction_kernel(layer_slices, L)
    vmem = pl.BlockSpec(memory_space=pltpu.MemorySpace.VMEM)
    out = pl.pallas_call(
        kernel,
        out_shape=jax.ShapeDtypeStruct((Bp, PADW), jnp.float32),
        in_specs=[vmem, vmem, vmem],
        out_specs=vmem,
    )(s, x2, params_buf)

    # Slice the fused, padded output back to the two logical heads.
    policy_logits = out[:B, :A]
    value = out[:B, A:A + Vdim]
    return policy_logits, value


def reference(x, policy_params, value_params):
    h0 = jnp.mean(x.astype(jnp.float32), axis=(2, 3))

    def head(h, params):
        for i, (w, b) in enumerate(params):
            h = h @ w + b
            if i < len(params) - 1:
                h = jnp.maximum(h, 0.0)
        return h

    return head(h0, policy_params), head(h0, value_params)


if __name__ == "__main__":
    # Module config consistent with the PyTorch forward pass.
    num_channels = 32
    action_space_size = 16
    fc_policy_layers = [32]
    fc_value_layers = [32]
    support_size = 10          # value output dim = 2*support_size + 1 = 21
    # reduced_channels_policy / reduced_channels_value are unused in forward().

    B, H, W = 2, 8, 8

    key = jax.random.PRNGKey(0)
    key, kx = jax.random.split(key)
    x = jax.random.normal(kx, (B, num_channels, H, W), jnp.float32)

    policy_params, key = make_head_params(key, num_channels, fc_policy_layers, action_space_size)
    value_params, key = make_head_params(key, num_channels, fc_value_layers, 2 * support_size + 1)

    policy_logits, value = prediction_network(x, policy_params, value_params)
    jax.block_until_ready((policy_logits, value))

    ref_policy, ref_value = reference(x, policy_params, value_params)
    assert policy_logits.shape == (B, action_space_size)
    assert value.shape == (B, 2 * support_size + 1)
    assert jnp.allclose(policy_logits, ref_policy, atol=1e-4, rtol=1e-4)
    assert jnp.allclose(value, ref_value, atol=1e-4, rtol=1e-4)

    print("KERNEL_OK")
</pallas_src>

<mosaic_0001>
module attributes {stable_mosaic.version = 11 : i64} {
  func.func @kernel(%arg0: memref<8x128xf32, #tpu.memory_space<vmem>>, %arg1: memref<128x128xf32, #tpu.memory_space<vmem>>, %arg2: memref<272x128xf32, #tpu.memory_space<vmem>>, %arg3: memref<8x128xf32, #tpu.memory_space<vmem>>) attributes {dimension_semantics = [], scalar_prefetch = 0 : i64, scratch_operands = 0 : i64, tpu.core_type = #tpu.core_type<tc>} {
    %c0 = arith.constant 0 : index
    %c0_0 = arith.constant 0 : index
    %0 = vector.load %arg0[%c0, %c0_0] : memref<8x128xf32, #tpu.memory_space<vmem>>, vector<8x128xf32>
    %c0_1 = arith.constant 0 : index
    %c0_2 = arith.constant 0 : index
    %1 = vector.load %arg1[%c0_1, %c0_2] : memref<128x128xf32, #tpu.memory_space<vmem>>, vector<128x128xf32>
    %cst = arith.constant dense<0.000000e+00> : vector<8x128xf32>
    %2 = tpu.matmul %0, %1, %cst {dimension_numbers = #tpu.dot_dimension_numbers<[1], [0], [0], [1], [0, 0, 1, 1], [], []>} : vector<8x128xf32>, vector<128x128xf32>, vector<8x128xf32> -> vector<8x128xf32>
    %c0_3 = arith.constant 0 : index
    %c0_4 = arith.constant 0 : index
    %3 = vector.load %arg2[%c0_3, %c0_4] : memref<272x128xf32, #tpu.memory_space<vmem>>, vector<128x128xf32>
    %c128 = arith.constant 128 : index
    %c0_5 = arith.constant 0 : index
    %4 = vector.load %arg2[%c128, %c0_5] : memref<272x128xf32, #tpu.memory_space<vmem>>, vector<1x128xf32>
    %cst_6 = arith.constant dense<0.000000e+00> : vector<8x128xf32>
    %5 = tpu.matmul %2, %3, %cst_6 {dimension_numbers = #tpu.dot_dimension_numbers<[1], [0], [0], [1], [0, 0, 1, 1], [], []>} : vector<8x128xf32>, vector<128x128xf32>, vector<8x128xf32> -> vector<8x128xf32>
    %6 = vector.broadcast %4 : vector<1x128xf32> to vector<8x128xf32>
    %7 = arith.addf %5, %6 : vector<8x128xf32>
    %cst_7 = arith.constant 0.000000e+00 : f32
    %8 = vector.broadcast %cst_7 : f32 to vector<8x128xf32>
    %9 = arith.maximumf %7, %8 : vector<8x128xf32>
    %c136 = arith.constant 136 : index
    %c0_8 = arith.constant 0 : index
    %10 = vector.load %arg2[%c136, %c0_8] : memref<272x128xf32, #tpu.memory_space<vmem>>, vector<128x128xf32>
    %c264 = arith.constant 264 : index
    %c0_9 = arith.constant 0 : index
    %11 = vector.load %arg2[%c264, %c0_9] : memref<272x128xf32, #tpu.memory_space<vmem>>, vector<1x128xf32>
    %cst_10 = arith.constant dense<0.000000e+00> : vector<8x128xf32>
    %12 = tpu.matmul %9, %10, %cst_10 {dimension_numbers = #tpu.dot_dimension_numbers<[1], [0], [0], [1], [0, 0, 1, 1], [], []>} : vector<8x128xf32>, vector<128x128xf32>, vector<8x128xf32> -> vector<8x128xf32>
    %13 = vector.broadcast %11 : vector<1x128xf32> to vector<8x128xf32>
    %14 = arith.addf %12, %13 : vector<8x128xf32>
    %c0_11 = arith.constant 0 : index
    %c0_12 = arith.constant 0 : index
    %15 = vector.load %arg3[%c0_11, %c0_12] : memref<8x128xf32, #tpu.memory_space<vmem>>, vector<8x128xf32>
    tpu.vector_store %arg3[%c0_11, %c0_12], %14 {strides = array<i32>} : memref<8x128xf32, #tpu.memory_space<vmem>>, vector<8x128xf32>,
    return
  }
}

</mosaic_0001>

<llo_original>
// kernel: tpu_custom_call.1
$region0: #{tpu_custom_call.1}
  #allocation0 [shape = 'u32[]', space=smem, size = 0x4, offset = 0x4, fixed_abs, tag = 'smem constant byte address 0x4 - core index']
  #allocation1 [shape = 'u32[144,128]{1,0:T(1,128)}', space=vmem, size = 0x12000, scoped, tag = 'internal scratch']
  %s0 = inlined_call_operand.hbm [shape: f32[8,128], index: 0, kind: input, shape index: {}]
  %s1 = inlined_call_operand.hbm [shape: f32[128,128], index: 1, kind: input, shape index: {}]
  %s2 = inlined_call_operand.hbm [shape: f32[272,128], index: 2, kind: input, shape index: {}]
  %s3 = inlined_call_operand.hbm [shape: f32[8,128], index: 3, kind: output, shape index: {}]
  %s4 = sld [smem:[#allocation0]]
  $region34: #{tpu_custom_call.1} parent=0
    _
  %s6 = ssub.s32 1, %s4
  %s7 = scalar_select 0, %s6, %s4
  $region1: #{tpu_custom_call.1} parent=0
    #allocation2 [shape = 'u8[4096]{0}', space=vmem, size = 0x1000, scoped, tag = 'input window, operand 0, single buffered']
    #allocation3 [shape = 's32[1]{0}', space=sflag, size = 0x4, scoped, tag = 'scoped memory for tpu_custom_call.1']
    #allocation4 [shape = 's32[1]{0}', space=sflag, size = 0x4, scoped, tag = 'scoped memory for tpu_custom_call.1']
    #allocation5 [shape = 'u8[65536]{0}', space=vmem, size = 0x10000, scoped, tag = 'input window, operand 1, single buffered']
    #allocation6 [shape = 's32[1]{0}', space=sflag, size = 0x4, scoped, tag = 'scoped memory for tpu_custom_call.1']
    #allocation7 [shape = 'u8[139264]{0}', space=vmem, size = 0x22000, scoped, tag = 'input window, operand 2, single buffered']
    #allocation8 [shape = 'u8[4096]{0}', space=vmem, size = 0x1000, scoped, tag = 'output window, operand 0, single buffered']
    %8 = vsyncpa [#allocation3], 0
    %9 = vsyncpa [#allocation6], 0
    %10 = vsyncpa [#allocation4], 0
    // Predicated region
    $region2: #{tpu_custom_call.1} parent=1 // pred_check
      _
    $region3: #{tpu_custom_call.1} parent=1 // pred_check_branch
      %12 = sbr.rel (0) target = $region5
    $region4: #{tpu_custom_call.1} parent=1 // pred_region
      %s14 = ssub.s32 128, 128
      %15 = vsyncadd [#allocation3], %s14
      %s17 = sshll.u32 [#allocation2], 4
      %s18 = int_to_ptr.vmem [resolvable:$true] %s17
      %20 = dma.hbm_to_vmem [thread:$0]  %s0, 128, %s18, [#allocation3]
    $region5: #{tpu_custom_call.1} parent=1 // pred_fallthru
      _
    // Predicated region
    $region6: #{tpu_custom_call.1} parent=1 // pred_check
      _
    $region7: #{tpu_custom_call.1} parent=1 // pred_check_branch
      %22 = sbr.rel (0) target = $region9
    $region8: #{tpu_custom_call.1} parent=1 // pred_region
      %s24 = ssub.s32 2048, 2048
      %25 = vsyncadd [#allocation6], %s24
      %s26 = sshll.u32 [#allocation5], 4
      %s27 = int_to_ptr.vmem [resolvable:$true] %s26
      %32 = dma.hbm_to_vmem [thread:$0]  %s1, 2048, %s27, [#allocation6], 128, 128, 8
    $region9: #{tpu_custom_call.1} parent=1 // pred_fallthru
      _
    // Predicated region
    $region10: #{tpu_custom_call.1} parent=1 // pred_check
      _
    $region11: #{tpu_custom_call.1} parent=1 // pred_check_branch
      %34 = sbr.rel (0) target = $region13
    $region12: #{tpu_custom_call.1} parent=1 // pred_region
      %s36 = ssub.s32 4352, 4352
      %37 = vsyncadd [#allocation6], %s36
      %s38 = sshll.u32 [#allocation7], 4
      %s39 = int_to_ptr.vmem [resolvable:$true] %s38
      %44 = dma.hbm_to_vmem [thread:$0]  %s2, 4352, %s39, [#allocation6], 128, 128, 8
    $region13: #{tpu_custom_call.1} parent=1 // pred_fallthru
      _
    // Predicated region
    $region14: #{tpu_custom_call.1} parent=1 // pred_check
      _
    $region15: #{tpu_custom_call.1} parent=1 // pred_check_branch
      %46 = sbr.rel (0) target = $region17
    $region16: #{tpu_custom_call.1} parent=1 // pred_region
      %47 = dma.done [#allocation3], 128
    $region17: #{tpu_custom_call.1} parent=1 // pred_fallthru
      _
    // Predicated region
    $region18: #{tpu_custom_call.1} parent=1 // pred_check
      _
    $region19: #{tpu_custom_call.1} parent=1 // pred_check_branch
      %49 = sbr.rel (0) target = $region21
    $region20: #{tpu_custom_call.1} parent=1 // pred_region
      %50 = dma.done [#allocation6], 2048
    $region21: #{tpu_custom_call.1} parent=1 // pred_fallthru
      _
    // Predicated region
    $region22: #{tpu_custom_call.1} parent=1 // pred_check
      _
    $region23: #{tpu_custom_call.1} parent=1 // pred_check_branch
      %52 = sbr.rel (0) target = $region25
    $region24: #{tpu_custom_call.1} parent=1 // pred_region
      %53 = dma.done [#allocation6], 4352
    $region25: #{tpu_custom_call.1} parent=1 // pred_fallthru
      _
    %v54 = vld [vmem:[#allocation2] sm:$0xff]
    %v55 = vld [vmem:[#allocation5] sm:$0xff]
    %v56 = vld [vmem:[#allocation5 + $0x8] sm:$0xff]
    %v57 = vld [vmem:[#allocation5 + $0x10] sm:$0xff]
    %v58 = vld [vmem:[#allocation5 + $0x18] sm:$0xff]
    %v59 = vld [vmem:[#allocation5 + $0x20] sm:$0xff]
    %v60 = vld [vmem:[#allocation5 + $0x28] sm:$0xff]
    %v61 = vld [vmem:[#allocation5 + $0x30] sm:$0xff]
    %v62 = vld [vmem:[#allocation5 + $0x38] sm:$0xff]
    %v63 = vld [vmem:[#allocation5 + $0x40] sm:$0xff]
    %v64 = vld [vmem:[#allocation5 + $0x48] sm:$0xff]
    %v65 = vld [vmem:[#allocation5 + $0x50] sm:$0xff]
    %v66 = vld [vmem:[#allocation5 + $0x58] sm:$0xff]
    %v67 = vld [vmem:[#allocation5 + $0x60] sm:$0xff]
    %v68 = vld [vmem:[#allocation5 + $0x68] sm:$0xff]
    %v69 = vld [vmem:[#allocation5 + $0x70] sm:$0xff]
    %v70 = vld [vmem:[#allocation5 + $0x78] sm:$0xff]
    %71 = vmatprep.subr.mxu0 0.0
    %72 = vmatpush1.msra.mxu0 %v55
    %73 = vmatprep.subr.mxu0 0.0
    %74 = vmatpush1.msra.mxu0 %v56
    %75 = vmatprep.subr.mxu0 0.0
    %76 = vmatpush1.msra.mxu0 %v57
    %77 = vmatprep.subr.mxu0 0.0
    %78 = vmatpush1.msra.mxu0 %v58
    %79 = vmatprep.subr.mxu0 0.0
    %80 = vmatpush1.msra.mxu0 %v59
    %81 = vmatprep.subr.mxu0 0.0
    %82 = vmatpush1.msra.mxu0 %v60
    %83 = vmatprep.subr.mxu0 0.0
    %84 = vmatpush1.msra.mxu0 %v61
    %85 = vmatprep.subr.mxu0 0.0
    %86 = vmatpush1.msra.mxu0 %v62
    %87 = vmatprep.subr.mxu0 0.0
    %88 = vmatpush1.msra.mxu0 %v63
    %89 = vmatprep.subr.mxu0 0.0
    %90 = vmatpush1.msra.mxu0 %v64
    %91 = vmatprep.subr.mxu0 0.0
    %92 = vmatpush1.msra.mxu0 %v65
    %93 = vmatprep.subr.mxu0 0.0
    %94 = vmatpush1.msra.mxu0 %v66
    %95 = vmatprep.subr.mxu0 0.0
    %96 = vmatpush1.msra.mxu0 %v67
    %97 = vmatprep.subr.mxu0 0.0
    %98 = vmatpush1.msra.mxu0 %v68
    %99 = vmatprep.subr.mxu0 0.0
    %100 = vmatpush1.msra.mxu0 %v69
    %101 = vmatprep.subr.mxu0 0.0
    %102 = vmatpush1.msra.mxu0 %v70
    %103 = vmatprep.subr.mxu0 0.0
    %104 = vmatpush1.msra.mxu0 0.0
    %105 = vmatprep.subr.mxu0 0.0
    %106 = vmatpush1.msra.mxu0 0.0
    %107 = vmatprep.subr.mxu0 0.0
    %108 = vmatpush1.msra.mxu0 0.0
    %109 = vmatprep.subr.mxu0 0.0
    %110 = vmatpush1.msra.mxu0 0.0
    %111 = vmatprep.subr.mxu0 0.0
    %112 = vmatpush1.msra.mxu0 0.0
    %113 = vmatprep.subr.mxu0 0.0
    %114 = vmatpush1.msra.mxu0 0.0
    %115 = vmatprep.subr.mxu0 0.0
    %116 = vmatpush1.msra.mxu0 0.0
    %117 = vmatprep.subr.mxu0 0.0
    %118 = vmatpush1.msra.mxu0 0.0
    %119 = vmatprep.subr.mxu0 0.0
    %120 = vmatpush1.msra.mxu0 0.0
    %121 = vmatprep.subr.mxu0 0.0
    %122 = vmatpush1.msra.mxu0 0.0
    %123 = vmatprep.subr.mxu0 0.0
    %124 = vmatpush1.msra.mxu0 0.0
    %125 = vmatprep.subr.mxu0 0.0
    %126 = vmatpush1.msra.mxu0 0.0
    %127 = vmatprep.subr.mxu0 0.0
    %128 = vmatpush1.msra.mxu0 0.0
    %129 = vmatprep.subr.mxu0 0.0
    %130 = vmatpush1.msra.mxu0 0.0
    %131 = vmatprep.subr.mxu0 0.0
    %132 = vmatpush1.msra.mxu0 0.0
    %133 = vmatprep.subr.mxu0 0.0
    %134 = vmatpush1.msra.mxu0 0.0
    %135 = vmatprep.mubr.f32.mxu0 0.0
    %136 = vmatmul.mubr.f32.gmra.mrb[0].mxu0 %v54
    %v137 = vpop.f32.mrb[0].mxu0
    %v138 = vadd.f32 0.0, %v137
    %v139 = vpop.f32.mrb[0].mxu0
    %140 = vdwg.mxu0
    %v141 = vld [vmem:[#allocation7] sm:$0xff]
    %v142 = vld [vmem:[#allocation7 + $0x8] sm:$0xff]
    %v143 = vld [vmem:[#allocation7 + $0x10] sm:$0xff]
    %v144 = vld [vmem:[#allocation7 + $0x18] sm:$0xff]
    %v145 = vld [vmem:[#allocation7 + $0x20] sm:$0xff]
    %v146 = vld [vmem:[#allocation7 + $0x28] sm:$0xff]
    %v147 = vld [vmem:[#allocation7 + $0x30] sm:$0xff]
    %v148 = vld [vmem:[#allocation7 + $0x38] sm:$0xff]
    %v149 = vld [vmem:[#allocation7 + $0x40] sm:$0xff]
    %v150 = vld [vmem:[#allocation7 + $0x48] sm:$0xff]
    %v151 = vld [vmem:[#allocation7 + $0x50] sm:$0xff]
    %v152 = vld [vmem:[#allocation7 + $0x58] sm:$0xff]
    %v153 = vld [vmem:[#allocation7 + $0x60] sm:$0xff]
    %v154 = vld [vmem:[#allocation7 + $0x68] sm:$0xff]
    %v155 = vld [vmem:[#allocation7 + $0x70] sm:$0xff]
    %v156 = vld [vmem:[#allocation7 + $0x78] sm:$0xff]
    %v157 = vld [vmem:[#allocation7 + $0x80] sm:$0x1]
    %v158 = vlaneseq
    %v159 = vshrl.u32 %v158, 7
    %v160 = vsub.s32 0, %v159
    %v161 = vrot.slane %v157, %v160
    %162 = vmatprep.subr.mxu0 0.0
    %163 = vmatpush1.msra.mxu0 %v141
    %164 = vmatprep.subr.mxu0 0.0
    %165 = vmatpush1.msra.mxu0 %v142
    %166 = vmatprep.subr.mxu0 0.0
    %167 = vmatpush1.msra.mxu0 %v143
    %168 = vmatprep.subr.mxu0 0.0
    %169 = vmatpush1.msra.mxu0 %v144
    %170 = vmatprep.subr.mxu0 0.0
    %171 = vmatpush1.msra.mxu0 %v145
    %172 = vmatprep.subr.mxu0 0.0
    %173 = vmatpush1.msra.mxu0 %v146
    %174 = vmatprep.subr.mxu0 0.0
    %175 = vmatpush1.msra.mxu0 %v147
    %176 = vmatprep.subr.mxu0 0.0
    %177 = vmatpush1.msra.mxu0 %v148
    %178 = vmatprep.subr.mxu0 0.0
    %179 = vmatpush1.msra.mxu0 %v149
    %180 = vmatprep.subr.mxu0 0.0
    %181 = vmatpush1.msra.mxu0 %v150
    %182 = vmatprep.subr.mxu0 0.0
    %183 = vmatpush1.msra.mxu0 %v151
    %184 = vmatprep.subr.mxu0 0.0
    %185 = vmatpush1.msra.mxu0 %v152
    %186 = vmatprep.subr.mxu0 0.0
    %187 = vmatpush1.msra.mxu0 %v153
    %188 = vmatprep.subr.mxu0 0.0
    %189 = vmatpush1.msra.mxu0 %v154
    %190 = vmatprep.subr.mxu0 0.0
    %191 = vmatpush1.msra.mxu0 %v155
    %192 = vmatprep.subr.mxu0 0.0
    %193 = vmatpush1.msra.mxu0 %v156
    %194 = vmatprep.subr.mxu0 0.0
    %195 = vmatpush1.msra.mxu0 0.0
    %196 = vmatprep.subr.mxu0 0.0
    %197 = vmatpush1.msra.mxu0 0.0
    %198 = vmatprep.subr.mxu0 0.0
    %199 = vmatpush1.msra.mxu0 0.0
    %200 = vmatprep.subr.mxu0 0.0
    %201 = vmatpush1.msra.mxu0 0.0
    %202 = vmatprep.subr.mxu0 0.0
    %203 = vmatpush1.msra.mxu0 0.0
    %204 = vmatprep.subr.mxu0 0.0
    %205 = vmatpush1.msra.mxu0 0.0
    %206 = vmatprep.subr.mxu0 0.0
    %207 = vmatpush1.msra.mxu0 0.0
    %208 = vmatprep.subr.mxu0 0.0
    %209 = vmatpush1.msra.mxu0 0.0
    %210 = vmatprep.subr.mxu0 0.0
    %211 = vmatpush1.msra.mxu0 0.0
    %212 = vmatprep.subr.mxu0 0.0
    %213 = vmatpush1.msra.mxu0 0.0
    %214 = vmatprep.subr.mxu0 0.0
    %215 = vmatpush1.msra.mxu0 0.0
    %216 = vmatprep.subr.mxu0 0.0
    %217 = vmatpush1.msra.mxu0 0.0
    %218 = vmatprep.subr.mxu0 0.0
    %219 = vmatpush1.msra.mxu0 0.0
    %220 = vmatprep.subr.mxu0 0.0
    %221 = vmatpush1.msra.mxu0 0.0
    %222 = vmatprep.subr.mxu0 0.0
    %223 = vmatpush1.msra.mxu0 0.0
    %224 = vmatprep.subr.mxu0 0.0
    %225 = vmatpush1.msra.mxu0 0.0
    %226 = vmatprep.mubr.f32.mxu0 0.0
    %227 = vmatmul.mubr.f32.gmra.mrb[0].mxu0 %v138
    %v228 = vpop.f32.mrb[0].mxu0
    %v229 = vadd.f32 %v161, %v228
    %v230 = vpop.f32.mrb[0].mxu0
    %231 = vdwg.mxu0
    %v232 = vmax.f32 %v229, 0.0
    %v233 = vld [vmem:[#allocation7 + $0x88] sm:$0xff]
    %v234 = vld [vmem:[#allocation7 + $0x90] sm:$0xff]
    %v235 = vld [vmem:[#allocation7 + $0x98] sm:$0xff]
    %v236 = vld [vmem:[#allocation7 + $0xa0] sm:$0xff]
    %v237 = vld [vmem:[#allocation7 + $0xa8] sm:$0xff]
    %v238 = vld [vmem:[#allocation7 + $0xb0] sm:$0xff]
    %v239 = vld [vmem:[#allocation7 + $0xb8] sm:$0xff]
    %v240 = vld [vmem:[#allocation7 + $0xc0] sm:$0xff]
    %v241 = vld [vmem:[#allocation7 + $0xc8] sm:$0xff]
    %v242 = vld [vmem:[#allocation7 + $0xd0] sm:$0xff]
    %v243 = vld [vmem:[#allocation7 + $0xd8] sm:$0xff]
    %v244 = vld [vmem:[#allocation7 + $0xe0] sm:$0xff]
    %v245 = vld [vmem:[#allocation7 + $0xe8] sm:$0xff]
    %v246 = vld [vmem:[#allocation7 + $0xf0] sm:$0xff]
    %v247 = vld [vmem:[#allocation7 + $0xf8] sm:$0xff]
    %v248 = vld [vmem:[#allocation7 + $0x100] sm:$0xff]
    %v249 = vld [vmem:[#allocation7 + $0x108] sm:$0x1]
    %v250 = vlaneseq
    %v251 = vshrl.u32 %v250, 7
    %v252 = vsub.s32 0, %v251
    %v253 = vrot.slane %v249, %v252
    %254 = vmatprep.subr.mxu0 0.0
    %255 = vmatpush1.msra.mxu0 %v233
    %256 = vmatprep.subr.mxu0 0.0
    %257 = vmatpush1.msra.mxu0 %v234
    %258 = vmatprep.subr.mxu0 0.0
    %259 = vmatpush1.msra.mxu0 %v235
    %260 = vmatprep.subr.mxu0 0.0
    %261 = vmatpush1.msra.mxu0 %v236
    %262 = vmatprep.subr.mxu0 0.0
    %263 = vmatpush1.msra.mxu0 %v237
    %264 = vmatprep.subr.mxu0 0.0
    %265 = vmatpush1.msra.mxu0 %v238
    %266 = vmatprep.subr.mxu0 0.0
    %267 = vmatpush1.msra.mxu0 %v239
    %268 = vmatprep.subr.mxu0 0.0
    %269 = vmatpush1.msra.mxu0 %v240
    %270 = vmatprep.subr.mxu0 0.0
    %271 = vmatpush1.msra.mxu0 %v241
    %272 = vmatprep.subr.mxu0 0.0
    %273 = vmatpush1.msra.mxu0 %v242
    %274 = vmatprep.subr.mxu0 0.0
    %275 = vmatpush1.msra.mxu0 %v243
    %276 = vmatprep.subr.mxu0 0.0
    %277 = vmatpush1.msra.mxu0 %v244
    %278 = vmatprep.subr.mxu0 0.0
    %279 = vmatpush1.msra.mxu0 %v245
    %280 = vmatprep.subr.mxu0 0.0
    %281 = vmatpush1.msra.mxu0 %v246
    %282 = vmatprep.subr.mxu0 0.0
    %283 = vmatpush1.msra.mxu0 %v247
    %284 = vmatprep.subr.mxu0 0.0
    %285 = vmatpush1.msra.mxu0 %v248
    %286 = vmatprep.subr.mxu0 0.0
    %287 = vmatpush1.msra.mxu0 0.0
    %288 = vmatprep.subr.mxu0 0.0
    %289 = vmatpush1.msra.mxu0 0.0
    %290 = vmatprep.subr.mxu0 0.0
    %291 = vmatpush1.msra.mxu0 0.0
    %292 = vmatprep.subr.mxu0 0.0
    %293 = vmatpush1.msra.mxu0 0.0
    %294 = vmatprep.subr.mxu0 0.0
    %295 = vmatpush1.msra.mxu0 0.0
    %296 = vmatprep.subr.mxu0 0.0
    %297 = vmatpush1.msra.mxu0 0.0
    %298 = vmatprep.subr.mxu0 0.0
    %299 = vmatpush1.msra.mxu0 0.0
    %300 = vmatprep.subr.mxu0 0.0
    %301 = vmatpush1.msra.mxu0 0.0
    %302 = vmatprep.subr.mxu0 0.0
    %303 = vmatpush1.msra.mxu0 0.0
    %304 = vmatprep.subr.mxu0 0.0
    %305 = vmatpush1.msra.mxu0 0.0
    %306 = vmatprep.subr.mxu0 0.0
    %307 = vmatpush1.msra.mxu0 0.0
    %308 = vmatprep.subr.mxu0 0.0
    %309 = vmatpush1.msra.mxu0 0.0
    %310 = vmatprep.subr.mxu0 0.0
    %311 = vmatpush1.msra.mxu0 0.0
    %312 = vmatprep.subr.mxu0 0.0
    %313 = vmatpush1.msra.mxu0 0.0
    %314 = vmatprep.subr.mxu0 0.0
    %315 = vmatpush1.msra.mxu0 0.0
    %316 = vmatprep.subr.mxu0 0.0
    %317 = vmatpush1.msra.mxu0 0.0
    %318 = vmatprep.mubr.f32.mxu0 0.0
    %319 = vmatmul.mubr.f32.gmra.mrb[0].mxu0 %v232
    %v320 = vpop.f32.mrb[0].mxu0
    %v321 = vadd.f32 %v253, %v320
    %v322 = vpop.f32.mrb[0].mxu0
    %323 = vdwg.mxu0
    %324 = vst [vmem:[#allocation8] sm:$0xff] %v321
    // Predicated region
    $region26: #{tpu_custom_call.1} parent=1 // pred_check
      _
    $region27: #{tpu_custom_call.1} parent=1 // pred_check_branch
      %326 = sbr.rel (0) target = $region29
    $region28: #{tpu_custom_call.1} parent=1 // pred_region
      %s328 = ssub.s32 128, 128
      %329 = vsyncadd [#allocation4], %s328
      %s331 = sshll.u32 [#allocation8], 4
      %s332 = int_to_ptr.vmem [resolvable:$true] %s331
      %334 = dma.vmem_to_hbm [thread:$0]  %s332, 128, %s3, [#allocation4]
    $region29: #{tpu_custom_call.1} parent=1 // pred_fallthru
      _
    // Predicated region
    $region30: #{tpu_custom_call.1} parent=1 // pred_check
      _
    $region31: #{tpu_custom_call.1} parent=1 // pred_check_branch
      %336 = sbr.rel (0) target = $region33
    $region32: #{tpu_custom_call.1} parent=1 // pred_region
      %337 = dma.done [#allocation4], 128
    $region33: #{tpu_custom_call.1} parent=1 // pred_fallthru
      _
    %338 = vsyncpa [#allocation3], 1
    %339 = vsyncpa [#allocation6], 1
    %340 = vsyncpa [#allocation4], 1

</llo_original>
